<compile_context>
chip_gen: v6e
topology: v6e:2x2x1
jax: 0.10.0
libtpu: 0.0.40
codegen_flags: <defaults>
</compile_context>

<pallas_src>
import functools

import jax
import jax.numpy as jnp
from jax import lax
from jax.experimental import pallas as pl
from jax.experimental.pallas import tpu as pltpu


def _round_up(x, m):
    return (x + m - 1) // m * m


def _vmem_capacity_bytes():
    try:
        cap = int(pltpu.get_tpu_info().vmem_capacity_bytes)
        if cap > 0:
            return cap
    except Exception:
        pass
    return 64 * 2**20          # conservative fallback (v7x per-TensorCore VMEM)


def _masked_conv1d_kernel(*refs, stride, dilation, c_in_p, tile_t, tap_groups,
                          has_halo):
    if has_halo:
        x_ref, h_ref, w_ref, out_ref = refs
        # Stitch the aligned tile and its halo tail in VMEM (both lane-aligned).
        xw = jnp.concatenate([x_ref[...], h_ref[...]], axis=-1)
    else:
        x_ref, w_ref, out_ref = refs
        xw = x_ref[...]                          # (S, C_in_p, win_len)

    w = w_ref[...]                               # (TILE_CO, K*C_in_p)
    acc = jnp.zeros(out_ref.shape, jnp.float32)  # (TILE_CO, TILE_T)
    for k0, k1 in tap_groups:                    # static python loop
        taps = [xw[(k * dilation) % stride, :,
                   (k * dilation) // stride:(k * dilation) // stride + tile_t]
                for k in range(k0, k1)]
        stacked = taps[0] if len(taps) == 1 else jnp.concatenate(taps, axis=0)
        acc = acc + jnp.dot(w[:, k0 * c_in_p:k1 * c_in_p], stacked,
                            preferred_element_type=jnp.float32)
    out_ref[...] = acc.astype(out_ref.dtype)


def masked_conv1d(x, lengths, weight, *, stride=1, padding=0, dilation=1,
                  use_mask=True, compute_dtype=None,
                  tile_t=None, tile_co=None, tap_fold=None,
                  weight_buffer_count=None):
    """Forward of MaskedConv1d.

    x:       (B, C_in, T)      float32
    lengths: (B,)              int
    weight:  (C_out, C_in, K)  float32
    returns (out, out_lengths) with out (B, C_out, T_out).
    """
    B, C_in, T = x.shape
    C_out, C_in_w, K = weight.shape
    assert C_in_w == C_in
    S, d, pad = int(stride), int(dilation), int(padding)

    out_dtype = x.dtype
    cdtype = jnp.dtype(compute_dtype) if compute_dtype is not None else x.dtype
    itemsize = jnp.dtype(cdtype).itemsize
    out_itemsize = jnp.dtype(out_dtype).itemsize

    T_out = (T + 2 * pad - d * (K - 1) - 1) // S + 1
    assert T_out > 0

    # ---- time tiling: lane-dense output tiles + small halo tail blocks ----
    max_o = ((K - 1) * d) // S                   # per-phase window halo
    HALO = _round_up(max_o, 128) if max_o > 0 else 0
    base = max(128, HALO)
    if tile_t is not None:
        TILE_T = _round_up(max(int(tile_t), base), base)
    else:
        cands = [c for c in (512, 384, 256, 128)
                 if c >= base and c % base == 0] or [base]
        TILE_T = min(cands, key=lambda c: (_round_up(T_out, c), -c))
    T_out_p = _round_up(T_out, TILE_T)
    n_t = T_out_p // TILE_T
    win_len = TILE_T + HALO

    # ---- C_in padded to the sublane granule -> folded MXU path always applies
    gran = max(8, 32 // itemsize)                # 8 (f32) / 16 (bf16)
    C_in_p = _round_up(C_in, gran)

    # ---- tap folding: contraction chunks of fold*C_in_p rows (<=1024, %256 pref)
    if tap_fold is not None:
        fold = max(1, min(int(tap_fold), K))
    else:
        max_fold = max(1, min(K, 1024 // C_in_p))
        fold = max_fold
        for align in (256, 128):
            f_ok = next((f for f in range(max_fold, 0, -1)
                         if (f * C_in_p) % align == 0), None)
            if f_ok is not None:
                fold = f_ok
                break
    tap_groups = tuple((k0, min(K, k0 + fold)) for k0 in range(0, K, fold))

    # ---- C_out tiling + VMEM budgeting ----
    vmem_cap = _vmem_capacity_bytes()
    budget = int(0.8 * vmem_cap)

    def _wbuf(tile_co):
        if weight_buffer_count is not None:
            return max(1, int(weight_buffer_count))
        w_blk = tile_co * K * C_in_p * itemsize
        return 1 if w_blk > (4 << 20) else 2     # single-buffer big weight tiles

    def _usage(tile_co, n_wbuf):
        in_main = 2 * S * C_in_p * TILE_T * itemsize
        in_halo = (2 * S * C_in_p * HALO * itemsize) if HALO else 0
        w_blk = tile_co * K * C_in_p * itemsize
        o_blk = 2 * tile_co * TILE_T * out_itemsize
        tmp = (S * C_in_p * win_len * itemsize           # concat window
               + fold * C_in_p * TILE_T * itemsize       # stacked operand
               + tile_co * TILE_T * 4)                   # f32 accumulator
        return in_main + in_halo + n_wbuf * w_blk + o_blk + tmp

    if tile_co is not None:
        TILE_CO = _round_up(min(int(tile_co), _round_up(C_out, 8)), 8)
    elif C_out < 128:
        TILE_CO = _round_up(C_out, 8)
    elif C_out % 256 == 0 and _usage(256, _wbuf(256)) <= budget:
        TILE_CO = 256                             # fill 256-wide MXU (v6e/v7x)
    else:
        TILE_CO = 128
    C_out_p = _round_up(C_out, TILE_CO)
    n_co = C_out_p // TILE_CO
    n_wbuf = _wbuf(TILE_CO)

    # ---- single fused wrapper pre-pass: mask, pad, phase de-interleave, cast ----
    if use_mask:
        tmask = (jnp.arange(T, dtype=jnp.int32)[None, :]
                 < lengths[:, None].astype(jnp.int32)).astype(x.dtype)
        x = x * tmask[:, None, :]
    need_data = -(-(T + pad) // S)               # ceil((T+pad)/S)
    phase_len = max(T_out_p + HALO, need_data)
    right_pad = phase_len * S - T - pad
    x_p = jnp.pad(x, ((0, 0), (0, C_in_p - C_in), (pad, right_pad)))
    # x_ph[b, p, c, j] = x_padded[b, c, j*S + p]  (unit-stride taps in-kernel)
    x_ph = (x_p.reshape(B, C_in_p, phase_len, S)
               .transpose(0, 3, 1, 2).astype(cdtype))

    # weight flattened tap-major, channels padded: w2[co, k*C_in_p + ci]
    w_p = jnp.pad(weight, ((0, C_out_p - C_out), (0, C_in_p - C_in), (0, 0)))
    w2 = w_p.transpose(0, 2, 1).reshape(C_out_p, K * C_in_p).astype(cdtype)

    kernel = functools.partial(
        _masked_conv1d_kernel, stride=S, dilation=d, c_in_p=C_in_p,
        tile_t=TILE_T, tap_groups=tap_groups, has_halo=HALO > 0)

    # ---- specs: grid = (co, b, ti) -> weight fetched once per C_out tile ----
    in_specs = [pl.BlockSpec((None, S, C_in_p, TILE_T),
                             lambda co, b, ti: (b, 0, 0, ti))]
    operands = [x_ph]
    if HALO:
        r_halo = TILE_T // HALO
        in_specs.append(pl.BlockSpec((None, S, C_in_p, HALO),
                                     lambda co, b, ti: (b, 0, 0, (ti + 1) * r_halo)))
        operands.append(x_ph)
    w_spec_kwargs = {}
    if n_wbuf != 2 and hasattr(pl, "Buffered"):
        w_spec_kwargs["pipeline_mode"] = pl.Buffered(n_wbuf)
    in_specs.append(pl.BlockSpec((TILE_CO, K * C_in_p),
                                 lambda co, b, ti: (co, 0), **w_spec_kwargs))
    operands.append(w2)
    out_spec = pl.BlockSpec((None, TILE_CO, TILE_T),
                            lambda co, b, ti: (b, co, ti))

    flops = 2 * B * C_out * C_in * K * T_out
    bytes_in = (n_co * B * S * C_in_p * (T_out_p + HALO) * itemsize
                + C_out_p * K * C_in_p * itemsize)
    bytes_out = B * C_out_p * T_out_p * out_itemsize
    cost = pl.CostEstimate(flops=int(flops), transcendentals=0,
                           bytes_accessed=int(bytes_in + bytes_out))

    need = _usage(TILE_CO, n_wbuf)
    vmem_limit = int(min(int(0.9 * vmem_cap), max(32 << 20, need + (16 << 20))))

    out = pl.pallas_call(
        kernel,
        out_shape=jax.ShapeDtypeStruct((B, C_out_p, T_out_p), out_dtype),
        grid_spec=pltpu.PrefetchScalarGridSpec(
            num_scalar_prefetch=0,
            grid=(n_co, B, n_t),
            in_specs=in_specs,
            out_specs=out_spec),
        compiler_params=pltpu.CompilerParams(
            dimension_semantics=("parallel", "parallel", "parallel"),
            vmem_limit_bytes=vmem_limit),
        cost_estimate=cost,
    )(*operands)

    if C_out_p != C_out or T_out_p != T_out:     # skip the crop when aligned
        out = out[:, :C_out, :T_out]
    out_lengths = (lengths + 2 * pad - d * (K - 1) - 1) // S + 1
    return out, out_lengths


def _reference(x, lengths, weight, *, stride, padding, dilation, use_mask):
    if use_mask:
        mask = (jnp.arange(x.shape[-1])[None, :] < lengths[:, None]).astype(x.dtype)
        x = x * mask[:, None, :]
    out = lax.conv_general_dilated(
        x, weight, window_strides=(stride,), padding=[(padding, padding)],
        rhs_dilation=(dilation,), dimension_numbers=("NCH", "OIH", "NCH"))
    K = weight.shape[-1]
    out_len = (lengths + 2 * padding - dilation * (K - 1) - 1) // stride + 1
    return out, out_len


if __name__ == "__main__":
    key = jax.random.PRNGKey(0)
    kx, kw1, kw2, kw3 = jax.random.split(key, 4)
    B = 2

    def make(C_in, C_out, K, T, kw):
        x = jax.random.normal(kx, (B, C_in, T), dtype=jnp.float32)
        bound = 1.0 / (C_in * K) ** 0.5
        w = jax.random.uniform(kw, (C_out, C_in, K), minval=-bound, maxval=bound,
                               dtype=jnp.float32)
        return x, w

    def check(x, lengths, w, cfg, atol=1e-5, rtol=1e-5, **kwargs):
        out, out_len = masked_conv1d(x, lengths, w, use_mask=True, **cfg, **kwargs)
        jax.block_until_ready((out, out_len))
        ref, ref_len = _reference(x, lengths, w, use_mask=True, **cfg)
        assert out.shape == ref.shape, (out.shape, ref.shape)
        assert jnp.allclose(out, ref, atol=atol, rtol=rtol), (cfg, kwargs)
        assert jnp.array_equal(out_len, ref_len), (cfg, kwargs)
        return out, ref

    T = 16
    lengths = jnp.array([16, 10], dtype=jnp.int32)
    conv_cfgs = [dict(stride=1, padding=1, dilation=1),
                 dict(stride=2, padding=2, dilation=2)]

    # f32 compute (matches PyTorch module numerics): unaligned + aligned C_in
    for (C_in, C_out, kw) in [(4, 8, kw1), (16, 16, kw2)]:
        x, w = make(C_in, C_out, 3, T, kw)
        for cfg in conv_cfgs:
            check(x, lengths, w, cfg)

    # pointwise conv (K=1, no-halo path)
    x, w = make(16, 16, 1, T, kw3)
    cfg = dict(stride=1, padding=0, dilation=1)
    out_pw, ref_pw = check(x, lengths, w, cfg)

    # single-buffered weight path (pipeline_mode=pl.Buffered(1)); skip quietly
    # if this JAX build rejects a buffer count of 1.
    try:
        out_sb, _ = masked_conv1d(x, lengths, w, use_mask=True,
                                  weight_buffer_count=1, **cfg)
        jax.block_until_ready(out_sb)
    except Exception:
        out_sb = None
    if out_sb is not None:
        out_sb = out_sb  # noqa
        assert jnp.allclose(out_sb, ref_pw, atol=1e-5, rtol=1e-5)

    # multi-tile time axis with dilation (exercises the halo tail blocks)
    T2 = 300
    lengths2 = jnp.array([300, 211], dtype=jnp.int32)
    x2, w2_ = make(8, 8, 3, T2, kw1)
    check(x2, lengths2, w2_, dict(stride=1, padding=2, dilation=2), tile_t=128)

    # bf16 matmul opt-in -- looser tolerance
    x, w = make(16, 16, 3, T, kw2)
    check(x, lengths, w, dict(stride=1, padding=1, dilation=1),
          atol=5e-2, rtol=5e-2, compute_dtype=jnp.bfloat16)

    print("KERNEL_OK")
</pallas_src>

<mosaic_0001>
module attributes {stable_mosaic.version = 11 : i64} {
  func.func @_masked_conv1d_kernel(%arg0: i32, %arg1: i32, %arg2: i32, %arg3: memref<1x1x8x128xf32, #tpu.memory_space<vmem>>, %arg4: memref<1x1x8x128xf32, #tpu.memory_space<vmem>>, %arg5: memref<8x24xf32, #tpu.memory_space<vmem>>, %arg6: memref<1x8x128xf32, #tpu.memory_space<vmem>>) attributes {dimension_semantics = [#tpu.dimension_semantics<parallel>, #tpu.dimension_semantics<parallel>, #tpu.dimension_semantics<parallel>], iteration_bounds = array<i64: 1, 2, 1>, scalar_prefetch = 0 : i64, scratch_operands = 0 : i64, tpu.core_type = #tpu.core_type<tc>, window_params = [{transform_indices = @transform_0, window_bounds = array<i64: 1, 1, 8, 128>}, {transform_indices = @transform_1, window_bounds = array<i64: 1, 1, 8, 128>}, {transform_indices = @transform_2, window_bounds = array<i64: 8, 24>}, {transform_indices = @transform_3, window_bounds = array<i64: 1, 8, 128>}]} {
    %c0 = arith.constant 0 : index
    %c0_0 = arith.constant 0 : index
    %c0_1 = arith.constant 0 : index
    %c0_2 = arith.constant 0 : index
    %0 = vector.load %arg3[%c0, %c0_0, %c0_1, %c0_2] : memref<1x1x8x128xf32, #tpu.memory_space<vmem>>, vector<1x1x8x128xf32>
    %1 = vector.shape_cast %0 : vector<1x1x8x128xf32> to vector<1x8x128xf32>
    %c0_3 = arith.constant 0 : index
    %c0_4 = arith.constant 0 : index
    %c0_5 = arith.constant 0 : index
    %c0_6 = arith.constant 0 : index
    %2 = vector.load %arg4[%c0_3, %c0_4, %c0_5, %c0_6] : memref<1x1x8x128xf32, #tpu.memory_space<vmem>>, vector<1x1x8x128xf32>
    %3 = vector.shape_cast %2 : vector<1x1x8x128xf32> to vector<1x8x128xf32>
    %4 = tpu.concatenate %1, %3 in 2 : vector<1x8x128xf32>, vector<1x8x128xf32> -> vector<1x8x256xf32>
    %c0_7 = arith.constant 0 : index
    %c0_8 = arith.constant 0 : index
    %5 = vector.load %arg5[%c0_7, %c0_8] : memref<8x24xf32, #tpu.memory_space<vmem>>, vector<8x24xf32>
    %cst = arith.constant 0.000000e+00 : f32
    %6 = vector.broadcast %cst : f32 to vector<8x128xf32>
    %7 = vector.extract_strided_slice %4 {offsets = [0, 0, 0], sizes = [1, 8, 128], strides = [1, 1, 1]} : vector<1x8x256xf32> to vector<1x8x128xf32>
    %8 = vector.shape_cast %7 : vector<1x8x128xf32> to vector<8x128xf32>
    %9 = vector.extract_strided_slice %4 {offsets = [0, 0, 1], sizes = [1, 8, 128], strides = [1, 1, 1]} : vector<1x8x256xf32> to vector<1x8x128xf32>
    %10 = vector.shape_cast %9 : vector<1x8x128xf32> to vector<8x128xf32>
    %11 = vector.extract_strided_slice %4 {offsets = [0, 0, 2], sizes = [1, 8, 128], strides = [1, 1, 1]} : vector<1x8x256xf32> to vector<1x8x128xf32>
    %12 = vector.shape_cast %11 : vector<1x8x128xf32> to vector<8x128xf32>
    %13 = tpu.concatenate %8, %10, %12 in 0 : vector<8x128xf32>, vector<8x128xf32>, vector<8x128xf32> -> vector<24x128xf32>
    %cst_9 = arith.constant dense<0.000000e+00> : vector<8x128xf32>
    %14 = tpu.matmul %5, %13, %cst_9 {dimension_numbers = #tpu.dot_dimension_numbers<[1], [0], [0], [1], [0, 0, 1, 1], [], []>} : vector<8x24xf32>, vector<24x128xf32>, vector<8x128xf32> -> vector<8x128xf32>
    %15 = arith.addf %6, %14 : vector<8x128xf32>
    %c0_10 = arith.constant 0 : index
    %c0_11 = arith.constant 0 : index
    %c0_12 = arith.constant 0 : index
    %16 = vector.load %arg6[%c0_10, %c0_11, %c0_12] : memref<1x8x128xf32, #tpu.memory_space<vmem>>, vector<1x8x128xf32>
    %17 = vector.shape_cast %16 : vector<1x8x128xf32> to vector<8x128xf32>
    %18 = vector.shape_cast %15 : vector<8x128xf32> to vector<1x8x128xf32>
    tpu.vector_store %arg6[%c0_10, %c0_11, %c0_12], %18 {strides = array<i32>} : memref<1x8x128xf32, #tpu.memory_space<vmem>>, vector<1x8x128xf32>,
    return
  }
  func.func @transform_0(%arg0: i32, %arg1: i32, %arg2: i32) -> (i32, i32, i32, i32) {
    %c0_i32 = arith.constant 0 : i32
    %c0_i32_0 = arith.constant 0 : i32
    %c0_i32_1 = arith.constant 0 : i32
    return %arg1, %c0_i32, %c0_i32_0, %arg2 : i32, i32, i32, i32
  }
  func.func @transform_1(%arg0: i32, %arg1: i32, %arg2: i32) -> (i32, i32, i32, i32) {
    %c1_i32 = arith.constant 1 : i32
    %0 = arith.addi %arg2, %c1_i32 : i32
    %c1_i32_0 = arith.constant 1 : i32
    %1 = arith.muli %0, %c1_i32_0 : i32
    %c0_i32 = arith.constant 0 : i32
    %c0_i32_1 = arith.constant 0 : i32
    %c0_i32_2 = arith.constant 0 : i32
    return %arg1, %c0_i32, %c0_i32_1, %1 : i32, i32, i32, i32
  }
  func.func @transform_2(%arg0: i32, %arg1: i32, %arg2: i32) -> (i32, i32) {
    %c0_i32 = arith.constant 0 : i32
    %c0_i32_0 = arith.constant 0 : i32
    return %arg0, %c0_i32 : i32, i32
  }
  func.func @transform_3(%arg0: i32, %arg1: i32, %arg2: i32) -> (i32, i32, i32) {
    %c0_i32 = arith.constant 0 : i32
    return %arg1, %arg0, %arg2 : i32, i32, i32
  }
}

</mosaic_0001>

<llo_original>
// kernel: tpu_custom_call.1
$region0: #{tpu_custom_call.1}
  #allocation0 [shape = 'u32[]', space=smem, size = 0x4, offset = 0x4, fixed_abs, tag = 'smem constant byte address 0x4 - core index']
  #allocation1 [shape = 'u32[144,128]{1,0:T(1,128)}', space=vmem, size = 0x12000, scoped, tag = 'internal scratch']
  %s0 = inlined_call_operand.hbm [shape: f32[2,1,8,256], index: 0, kind: input, shape index: {}]
  %s1 = inlined_call_operand.hbm [shape: f32[2,1,8,256], index: 1, kind: input, shape index: {}]
  %s2 = inlined_call_operand.hbm [shape: f32[8,24], index: 2, kind: input, shape index: {}]
  %s3 = inlined_call_operand.hbm [shape: f32[2,8,128], index: 3, kind: output, shape index: {}]
  %s4 = sld [smem:[#allocation0]]
  $region57: #{tpu_custom_call.1} parent=0
    _
  %s6 = ssub.s32 1, %s4
  %s7 = scalar_select 0, %s6, %s4
  $region1: #{tpu_custom_call.1} parent=0
    #allocation2 [shape = 'u8[8192]{0}', space=vmem, size = 0x2000, scoped, tag = 'input window, operand 0']
    #allocation3 [shape = 's32[2]{0}', space=sflag, size = 0x8, scoped, tag = 'scoped memory for tpu_custom_call.1']
    #allocation4 [shape = 's32[2]{0}', space=sflag, size = 0x8, scoped, tag = 'scoped memory for tpu_custom_call.1']
    #allocation5 [shape = 'u8[8192]{0}', space=vmem, size = 0x2000, scoped, tag = 'input window, operand 1']
    #allocation6 [shape = 's32[2]{0}', space=sflag, size = 0x8, scoped, tag = 'scoped memory for tpu_custom_call.1']
    #allocation7 [shape = 'u8[4096]{0}', space=vmem, size = 0x1000, scoped, tag = 'input window, operand 2, single buffered']
    #allocation8 [shape = 'u8[8192]{0}', space=vmem, size = 0x2000, scoped, tag = 'output window, operand 0']
    %8 = vsyncpa [#allocation3], 0
    %s9 = scalar_lea.sflag [#allocation3], 1
    %10 = vsyncpa %s9, 0
    %11 = vsyncpa [#allocation6], 0
    %s12 = scalar_lea.sflag [#allocation6], 1
    %13 = vsyncpa %s12, 0
    %14 = vsyncpa [#allocation4], 0
    %s15 = scalar_lea.sflag [#allocation4], 1
    %16 = vsyncpa %s15, 0
    loop: start=0, step=1, limit=4
    $region2: #{tpu_custom_call.1} parent=1 // loop_pre_header
      _
    $region3: #{tpu_custom_call.1} parent=1 // loop_header
      %s18 = sphi 0, %s22
      %p19 = scmp.ge.s32.totalorder %s18, 4
      %s25 = sphi 0, %s44
      %s26 = sphi 0, %s40
      %s27 = sphi 0, %s36
      %s28 = sphi 0, %s25
      %s29 = sphi 0, %s26
      %s30 = sphi 0, %s27
      %s31 = sphi 0, %s28
      %s32 = sphi 0, %s29
      %s33 = sphi 0, %s30
      %s49 = sphi 0, %s51
      %s52 = sphi 0, %s49
      %s53 = sphi 0, %s52
      %s69 = sphi 0, %s53
      %s79 = sphi 0, %s81
      %s82 = sphi 0, %s79
      %s83 = sphi 0, %s82
      %s99 = sphi 0, %s83
      %s105 = sphi 0, %s107
      %s108 = sphi 0, %s105
      %s109 = sphi 0, %s108
      %s125 = sphi 0, %s109
      %s135 = sphi 0, %s137
      %s138 = sphi 0, %s135
      %s139 = sphi 0, %s138
      %s155 = sphi 0, %s139
    $region4: #{tpu_custom_call.1} parent=1 // loop_header_branch
      %21 = sbr.rel (%p19) target = $region8
    $region5: #{tpu_custom_call.1} parent=1 // loop_body
      %s23 = ssub.s32 %s18, 1
      %s24 = ssub.s32 %s18, 2
      %s34 = sadd.s32 1, %s27
      %p35 = scmp.ge.s32.totalorder %s34, 1
      %s36 = scalar_select %p35, 0, %s34
      %s37 = sadd.s32 1, %s26
      %s38 = scalar_select %p35, %s37, %s26
      %p39 = scmp.ge.s32.totalorder %s38, 2
      %s40 = scalar_select %p39, 0, %s38
      %s41 = sadd.s32 1, %s25
      %s42 = scalar_select %p39, %s41, %s25
      %p43 = scmp.ge.s32.totalorder %s42, 1
      %s44 = scalar_select %p43, 0, %s42
      %s45 = ssub.s32 %s26, %s40
      %s46 = ssub.s32 %s27, %s36
      %s47 = sor.u32 %s45, %s46
      %p48 = scmp.eq.s32.totalorder %s47, 0
      %s50 = sadd.s32 %s49, 1
      %s51 = scalar_select %p48, %s49, %s50
      %p54 = pneg %p48
      %p55 = scmp.eq.s32.totalorder %s18, 1
      %p56 = por %p54, %p55
      %p57 = scmp.ne.s32.totalorder %s49, %s52
      %p58 = scmp.eq.s32.totalorder %s18, 0
      %p59 = por %p57, %p58
      %p60 = scmp.ne.s32.totalorder %s49, %s52
      %p61 = scmp.eq.s32.totalorder %s23, 1
      %p62 = por %p60, %p61
      %p63 = scmp.ne.s32.totalorder %s52, %s53
      %p64 = scmp.eq.s32.totalorder %s23, 0
      %p65 = por %p63, %p64
      %p66 = scmp.ne.s32.totalorder %s52, %s53
      %p67 = scmp.eq.s32.totalorder %s24, 1
      %p68 = por %p66, %p67
      %p70 = scmp.ne.s32.totalorder %s53, %s69
      %p71 = scmp.eq.s32.totalorder %s24, 0
      %p72 = por %p70, %p71
      %s73 = sadd.s32 %s27, 1
      %s74 = sadd.s32 %s36, 1
      %s75 = ssub.s32 %s26, %s40
      %s76 = ssub.s32 %s73, %s74
      %s77 = sor.u32 %s75, %s76
      %p78 = scmp.eq.s32.totalorder %s77, 0
      %s80 = sadd.s32 %s79, 1
      %s81 = scalar_select %p78, %s79, %s80
      %p84 = pneg %p78
      %p85 = scmp.eq.s32.totalorder %s18, 1
      %p86 = por %p84, %p85
      %p87 = scmp.ne.s32.totalorder %s79, %s82
      %p88 = scmp.eq.s32.totalorder %s18, 0
      %p89 = por %p87, %p88
      %p90 = scmp.ne.s32.totalorder %s79, %s82
      %p91 = scmp.eq.s32.totalorder %s23, 1
      %p92 = por %p90, %p91
      %p93 = scmp.ne.s32.totalorder %s82, %s83
      %p94 = scmp.eq.s32.totalorder %s23, 0
      %p95 = por %p93, %p94
      %p96 = scmp.ne.s32.totalorder %s82, %s83
      %p97 = scmp.eq.s32.totalorder %s24, 1
      %p98 = por %p96, %p97
      %p100 = scmp.ne.s32.totalorder %s83, %s99
      %p101 = scmp.eq.s32.totalorder %s24, 0
      %p102 = por %p100, %p101
      %s103 = ssub.s32 %s25, %s44
      %p104 = scmp.eq.s32.totalorder %s103, 0
      %s106 = sadd.s32 %s105, 1
      %s107 = scalar_select %p104, %s105, %s106
      %p110 = pneg %p104
      %p111 = scmp.eq.s32.totalorder %s18, 1
      %p112 = por %p110, %p111
      %p113 = scmp.ne.s32.totalorder %s105, %s108
      %p114 = scmp.eq.s32.totalorder %s18, 0
      %p115 = por %p113, %p114
      %p116 = scmp.ne.s32.totalorder %s105, %s108
      %p117 = scmp.eq.s32.totalorder %s23, 1
      %p118 = por %p116, %p117
      %p119 = scmp.ne.s32.totalorder %s108, %s109
      %p120 = scmp.eq.s32.totalorder %s23, 0
      %p121 = por %p119, %p120
      %p122 = scmp.ne.s32.totalorder %s108, %s109
      %p123 = scmp.eq.s32.totalorder %s24, 1
      %p124 = por %p122, %p123
      %p126 = scmp.ne.s32.totalorder %s109, %s125
      %p127 = scmp.eq.s32.totalorder %s24, 0
      %p128 = por %p126, %p127
      %s129 = ssub.s32 %s26, %s40
      %s130 = ssub.s32 %s25, %s44
      %s131 = sor.u32 %s129, %s130
      %s132 = ssub.s32 %s27, %s36
      %s133 = sor.u32 %s131, %s132
      %p134 = scmp.eq.s32.totalorder %s133, 0
      %s136 = sadd.s32 %s135, 1
      %s137 = scalar_select %p134, %s135, %s136
      %p140 = pneg %p134
      %p141 = scmp.eq.s32.totalorder %s18, 1
      %p142 = por %p140, %p141
      %p143 = scmp.ne.s32.totalorder %s135, %s138
      %p144 = scmp.eq.s32.totalorder %s18, 0
      %p145 = por %p143, %p144
      %p146 = scmp.ne.s32.totalorder %s135, %s138
      %p147 = scmp.eq.s32.totalorder %s23, 1
      %p148 = por %p146, %p147
      %p149 = scmp.ne.s32.totalorder %s138, %s139
      %p150 = scmp.eq.s32.totalorder %s23, 0
      %p151 = por %p149, %p150
      %p152 = scmp.ne.s32.totalorder %s138, %s139
      %p153 = scmp.eq.s32.totalorder %s24, 1
      %p154 = por %p152, %p153
      %p156 = scmp.ne.s32.totalorder %s139, %s155
      %p157 = scmp.eq.s32.totalorder %s24, 0
      %p158 = por %p156, %p157
      %p159 = scmp.le.s32.totalorder 1, %s18
      %p160 = scmp.lt.s32.totalorder %s18, 3
      %p161 = pnand %p159, %p160
      %p162 = pneg %p161
      // Predicated region
      $region9: #{tpu_custom_call.1} parent=5 // pred_check
        _
      $region10: #{tpu_custom_call.1} parent=5 // pred_check_branch
        %164 = sbr.rel (%p161) target = $region12
      $region11: #{tpu_custom_call.1} parent=5 // pred_region
        %s165 = ssub.s32 %s18, 1
        // Predicated region
        $region13: #{tpu_custom_call.1} parent=11 // pred_check
          %p166 = pneg %p121
        $region14: #{tpu_custom_call.1} parent=11 // pred_check_branch
          %168 = sbr.rel (%p166) target = $region16
        $region15: #{tpu_custom_call.1} parent=11 // pred_region
          %s170 = ssub.s32 128, 128
          %171 = vsyncadd [#allocation6], %s170
          %s172 = smul.addr %s28, 128
          %s173 = scalar_lea.hbm %s2, %s172
          %s175 = sshll.u32 [#allocation7], 4
          %s176 = int_to_ptr.vmem [resolvable:$true] %s175
          %178 = dma.hbm_to_vmem [thread:$0]  %s173, 128, %s176, [#allocation6]
        $region16: #{tpu_custom_call.1} parent=11 // pred_fallthru
          _
      $region12: #{tpu_custom_call.1} parent=5 // pred_fallthru
        _
      %p179 = scmp.lt.s32.totalorder %s18, 2
      // Predicated region
      $region17: #{tpu_custom_call.1} parent=5 // pred_check
        %p180 = pneg %p179
      $region18: #{tpu_custom_call.1} parent=5 // pred_check_branch
        %182 = sbr.rel (%p180) target = $region20
      $region19: #{tpu_custom_call.1} parent=5 // pred_region
        // Predicated region
        $region21: #{tpu_custom_call.1} parent=19 // pred_check
          %p183 = pneg %p59
        $region22: #{tpu_custom_call.1} parent=19 // pred_check_branch
          %185 = sbr.rel (%p183) target = $region24
        $region23: #{tpu_custom_call.1} parent=19 // pred_region
          %s186 = sand.u32 %s49, 1
          %s187 = scalar_lea.sflag [#allocation3], %s186
          %s188 = sand.u32 %s49, 1
          %s189 = smul.addr %s188, 8
          %s190 = scalar_lea.vmem [#allocation2], %s189
          %s192 = ssub.s32 128, 128
          %193 = vsyncadd %s187, %s192
          %s194 = smul.addr %s26, 2
          %s195 = sadd.s32 %s27, %s194
          %s196 = smul.addr %s195, 128
          %s197 = scalar_lea.hbm %s0, %s196
          %s199 = sshll.u32 %s190, 4
          %s200 = int_to_ptr.vmem [resolvable:$true] %s199
          %202 = dma.hbm_to_vmem [thread:$0]  %s197, 128, %s200, %s187
        $region24: #{tpu_custom_call.1} parent=19 // pred_fallthru
          _
        // Predicated region
        $region25: #{tpu_custom_call.1} parent=19 // pred_check
          %p203 = pneg %p89
        $region26: #{tpu_custom_call.1} parent=19 // pred_check_branch
          %205 = sbr.rel (%p203) target = $region28
        $region27: #{tpu_custom_call.1} parent=19 // pred_region
          %s206 = sand.u32 %s18, 1
          %s207 = scalar_lea.sflag [#allocation6], %s206
          %s208 = sand.u32 %s79, 1
          %s209 = smul.addr %s208, 8
          %s210 = scalar_lea.vmem [#allocation5], %s209
          %s211 = sadd.s32 %s27, 1
          %s213 = ssub.s32 128, 128
          %214 = vsyncadd %s207, %s213
          %s215 = smul.addr %s26, 2
          %s216 = sadd.s32 %s211, %s215
          %s217 = smul.addr %s216, 128
          %s218 = scalar_lea.hbm %s1, %s217
          %s220 = sshll.u32 %s210, 4
          %s221 = int_to_ptr.vmem [resolvable:$true] %s220
          %223 = dma.hbm_to_vmem [thread:$0]  %s218, 128, %s221, %s207
        $region28: #{tpu_custom_call.1} parent=19 // pred_fallthru
          _
      $region20: #{tpu_custom_call.1} parent=5 // pred_fallthru
        _
      %p224 = scmp.le.s32.totalorder 1, %s18
      %p225 = scmp.lt.s32.totalorder %s18, 3
      %p226 = pnand %p224, %p225
      %p227 = pneg %p226
      // Predicated region
      $region29: #{tpu_custom_call.1} parent=5 // pred_check
        _
      $region30: #{tpu_custom_call.1} parent=5 // pred_check_branch
        %229 = sbr.rel (%p226) target = $region32
      $region31: #{tpu_custom_call.1} parent=5 // pred_region
        %s230 = ssub.s32 %s18, 1
        %s231 = sand.u32 %s52, 1
        %s232 = scalar_lea.sflag [#allocation3], %s231
        %s233 = sand.u32 %s52, 1
        %s234 = smul.addr %s233, 8
        %s235 = scalar_lea.vmem [#allocation2], %s234
        // Predicated region
        $region33: #{tpu_custom_call.1} parent=31 // pred_check
          %p236 = pneg %p65
        $region34: #{tpu_custom_call.1} parent=31 // pred_check_branch
          %238 = sbr.rel (%p236) target = $region36
        $region35: #{tpu_custom_call.1} parent=31 // pred_region
          %239 = dma.done %s232, 128
        $region36: #{tpu_custom_call.1} parent=31 // pred_fallthru
          _
        %s240 = sand.u32 %s23, 1
        %s241 = scalar_lea.sflag [#allocation6], %s240
        %s242 = sand.u32 %s82, 1
        %s243 = smul.addr %s242, 8
        %s244 = scalar_lea.vmem [#allocation5], %s243
        // Predicated region
        $region37: #{tpu_custom_call.1} parent=31 // pred_check
          %p245 = pneg %p95
        $region38: #{tpu_custom_call.1} parent=31 // pred_check_branch
          %247 = sbr.rel (%p245) target = $region40
        $region39: #{tpu_custom_call.1} parent=31 // pred_region
          %248 = dma.done %s241, 128
        $region40: #{tpu_custom_call.1} parent=31 // pred_fallthru
          _
        // Predicated region
        $region41: #{tpu_custom_call.1} parent=31 // pred_check
          %p249 = pneg %p121
        $region42: #{tpu_custom_call.1} parent=31 // pred_check_branch
          %251 = sbr.rel (%p249) target = $region44
        $region43: #{tpu_custom_call.1} parent=31 // pred_region
          %252 = dma.done [#allocation6], 128
        $region44: #{tpu_custom_call.1} parent=31 // pred_fallthru
          _
        %s253 = sand.u32 %s52, 1
        %s254 = scalar_lea.sflag [#allocation3], %s253
        %s255 = sand.u32 %s52, 1
        %s256 = smul.addr %s255, 8
        %s257 = scalar_lea.vmem [#allocation2], %s256
        %p258 = pneg %p65
        %p259 = pneg %p62
        %s260 = sand.u32 %s23, 1
        %s261 = scalar_lea.sflag [#allocation6], %s260
        %s262 = sand.u32 %s82, 1
        %s263 = smul.addr %s262, 8
        %s264 = scalar_lea.vmem [#allocation5], %s263
        %p265 = pneg %p95
        %p266 = pneg %p92
        %p267 = pneg %p121
        %p268 = pneg %p118
        %p269 = pneg %p151
        %p270 = pneg %p148
        %s271 = sand.u32 %s138, 1
        %s272 = scalar_lea.sflag [#allocation4], %s271
        %s273 = sand.u32 %s138, 1
        %s274 = smul.addr %s273, 8
        %s275 = scalar_lea.vmem [#allocation8], %s274
        %s276 = sadd.s32 %s30, 1
        %v277 = vld [vmem:[%s235] sm:$0xff]
        %v278 = vld [vmem:[%s244] sm:$0xff]
        %v279 = vld [vmem:[#allocation7] sm:$0xff]
        %282 = vrot.lane.b32.xlu0 %v277, 127
        %v283 = vpop.permute.xlu0 %282
        %284 = vrot.lane.b32.xlu0 %v278, 127
        %v285 = vpop.permute.xlu0 %284
        %vm286 = vcmask 1039360
        %v287 = vsel %vm286, %v283, %v285
        %289 = vrot.lane.b32.xlu0 %v277, 126
        %v290 = vpop.permute.xlu0 %289
        %291 = vrot.lane.b32.xlu0 %v278, 126
        %v292 = vpop.permute.xlu0 %291
        %vm293 = vcmask 1031168
        %v294 = vsel %vm293, %v290, %v292
        %vm296 = vcmask 195584
        %v298 = vsel %vm296, %v279, 0
        %300 = vmatprep.subr.mxu0 0.0
        %301 = vmatpush1.msra.mxu0 0.0
        %302 = vmatprep.subr.mxu0 0.0
        %303 = vmatpush1.msra.mxu0 0.0
        %304 = vmatprep.subr.mxu0 0.0
        %305 = vmatpush1.msra.mxu0 0.0
        %306 = vmatprep.subr.mxu0 0.0
        %307 = vmatpush1.msra.mxu0 0.0
        %308 = vmatprep.subr.mxu0 0.0
        %309 = vmatpush1.msra.mxu0 0.0
        %310 = vmatprep.subr.mxu0 0.0
        %311 = vmatpush1.msra.mxu0 0.0
        %312 = vmatprep.subr.mxu0 0.0
        %313 = vmatpush1.msra.mxu0 0.0
        %314 = vmatprep.subr.mxu0 0.0
        %315 = vmatpush1.msra.mxu0 0.0
        %316 = vmatprep.subr.mxu0 0.0
        %317 = vmatpush1.msra.mxu0 0.0
        %318 = vmatprep.subr.mxu0 0.0
        %319 = vmatpush1.msra.mxu0 0.0
        %320 = vmatprep.subr.mxu0 0.0
        %321 = vmatpush1.msra.mxu0 0.0
        %322 = vmatprep.subr.mxu0 0.0
        %323 = vmatpush1.msra.mxu0 0.0
        %324 = vmatprep.subr.mxu0 0.0
        %325 = vmatpush1.msra.mxu0 0.0
        %326 = vmatprep.subr.mxu0 0.0
        %327 = vmatpush1.msra.mxu0 %v294
        %328 = vmatprep.subr.mxu0 0.0
        %329 = vmatpush1.msra.mxu0 %v287
        %330 = vmatprep.subr.mxu0 0.0
        %331 = vmatpush1.msra.mxu0 %v277
        %332 = vmatprep.subr.mxu0 0.0
        %333 = vmatpush2.msra.mxu0 0.0
        %334 = vmatprep.subr.mxu0 0.0
        %335 = vmatpush2.msra.mxu0 0.0
        %336 = vmatprep.subr.mxu0 0.0
        %337 = vmatpush2.msra.mxu0 0.0
        %338 = vmatprep.subr.mxu0 0.0
        %339 = vmatpush2.msra.mxu0 0.0
        %340 = vmatprep.subr.mxu0 0.0
        %341 = vmatpush2.msra.mxu0 0.0
        %342 = vmatprep.subr.mxu0 0.0
        %343 = vmatpush2.msra.mxu0 0.0
        %344 = vmatprep.subr.mxu0 0.0
        %345 = vmatpush2.msra.mxu0 0.0
        %346 = vmatprep.subr.mxu0 0.0
        %347 = vmatpush2.msra.mxu0 0.0
        %348 = vmatprep.subr.mxu0 0.0
        %349 = vmatpush2.msra.mxu0 0.0
        %350 = vmatprep.subr.mxu0 0.0
        %351 = vmatpush2.msra.mxu0 0.0
        %352 = vmatprep.subr.mxu0 0.0
        %353 = vmatpush2.msra.mxu0 0.0
        %354 = vmatprep.subr.mxu0 0.0
        %355 = vmatpush2.msra.mxu0 0.0
        %356 = vmatprep.subr.mxu0 0.0
        %357 = vmatpush2.msra.mxu0 0.0
        %358 = vmatprep.subr.mxu0 0.0
        %359 = vmatpush2.msra.mxu0 0.0
        %360 = vmatprep.subr.mxu0 0.0
        %361 = vmatpush2.msra.mxu0 0.0
        %362 = vmatprep.subr.mxu0 0.0
        %363 = vmatpush2.msra.mxu0 0.0
        %364 = vmatprep.mubr.f32.mxu0 0.0
        %365 = vmatmul.mubr.f32.gmra.mxu0 %v298
        %v366 = vpop.f32.mrf.mxu0
        %v367 = vadd.f32 0.0, %v366
        %v368 = vpop.f32.mrf.mxu0
        %369 = vdwg.mxu0
        %370 = vst [vmem:[%s275] sm:$0xff] %v367
        %s371 = sand.u32 %s138, 1
        %s372 = scalar_lea.sflag [#allocation4], %s371
        %s373 = sand.u32 %s138, 1
        %s374 = smul.addr %s373, 8
        %s375 = scalar_lea.vmem [#allocation8], %s374
        // Predicated region
        $region45: #{tpu_custom_call.1} parent=31 // pred_check
          %p376 = pneg %p148
        $region46: #{tpu_custom_call.1} parent=31 // pred_check_branch
          %378 = sbr.rel (%p376) target = $region48
        $region47: #{tpu_custom_call.1} parent=31 // pred_region
          %s380 = ssub.s32 128, 128
          %381 = vsyncadd %s372, %s380
          %s382 = sadd.s32 %s30, %s28
          %s383 = sadd.s32 %s382, %s29
          %s384 = smul.addr %s383, 128
          %s385 = scalar_lea.hbm %s3, %s384
          %s387 = sshll.u32 %s375, 4
          %s388 = int_to_ptr.vmem [resolvable:$true] %s387
          %390 = dma.vmem_to_hbm [thread:$0]  %s388, 128, %s385, %s372
        $region48: #{tpu_custom_call.1} parent=31 // pred_fallthru
          _
      $region32: #{tpu_custom_call.1} parent=5 // pred_fallthru
        _
      %p391 = scmp.le.s32.totalorder 2, %s18
      // Predicated region
      $region49: #{tpu_custom_call.1} parent=5 // pred_check
        %p392 = pneg %p391
      $region50: #{tpu_custom_call.1} parent=5 // pred_check_branch
        %394 = sbr.rel (%p392) target = $region52
      $region51: #{tpu_custom_call.1} parent=5 // pred_region
        %s395 = ssub.s32 %s18, 2
        // Predicated region
        $region53: #{tpu_custom_call.1} parent=51 // pred_check
          %p396 = pneg %p154
        $region54: #{tpu_custom_call.1} parent=51 // pred_check_branch
          %398 = sbr.rel (%p396) target = $region56
        $region55: #{tpu_custom_call.1} parent=51 // pred_region
          %s399 = sand.u32 %s139, 1
          %s400 = scalar_lea.sflag [#allocation4], %s399
          %s401 = sand.u32 %s139, 1
          %s402 = smul.addr %s401, 8
          %s403 = scalar_lea.vmem [#allocation8], %s402
          %404 = dma.done %s400, 128
        $region56: #{tpu_custom_call.1} parent=51 // pred_fallthru
          _
      $region52: #{tpu_custom_call.1} parent=5 // pred_fallthru
        _
    $region6: #{tpu_custom_call.1} parent=1 // loop_footer
      %s22 = sadd.s32 1, %s18
    $region7: #{tpu_custom_call.1} parent=1 // loop_footer_branch
      %17 = sbr.rel target = $region3
    $region8: #{tpu_custom_call.1} parent=1 // loop_exit
      _
    %405 = vsyncpa [#allocation3], 1
    %s406 = scalar_lea.sflag [#allocation3], 1
    %407 = vsyncpa %s406, 1
    %408 = vsyncpa [#allocation6], 1
    %s409 = scalar_lea.sflag [#allocation6], 1
    %410 = vsyncpa %s409, 1
    %411 = vsyncpa [#allocation4], 1
    %s412 = scalar_lea.sflag [#allocation4], 1
    %413 = vsyncpa %s412, 1

</llo_original>
